<compile_context>
chip_gen: v7x
topology: tpu7x:2x2x1
jax: 0.10.0
libtpu: 0.0.40
codegen_flags: <defaults>
</compile_context>

<pallas_src>
import math

import jax
import jax.numpy as jnp
import numpy as np
from jax import lax
from jax.experimental import pallas as pl
from jax.experimental.pallas import tpu as pltpu


# ---------------------------------------------------------------------------
# Kernel 1: hoisted input projections (one fused GEMM, tiled over rows)
# ---------------------------------------------------------------------------
def _proj_kernel(x_ref, w_ref, b_ref, gf_ref, gb_ref):
    G3 = gf_ref.shape[1]                                               # 3H
    g = (jnp.dot(x_ref[...], w_ref[...], preferred_element_type=jnp.float32)
         + b_ref[...])                                                 # (tile_m, 6H) f32
    g = g.astype(jnp.bfloat16)                                         # bf16 storage
    gf_ref[...] = g[:, :G3]
    gb_ref[...] = g[:, G3:]


def _input_projections(x, wih_cat, bih_cat, *, tile_m=512):
    """x: (T_pad, B, H) bf16 -> gates_f, gates_b: (T_pad, B, 3H) bf16."""
    T_pad, B, H = x.shape
    G6 = wih_cat.shape[1]                                              # 6H
    G3 = G6 // 2
    rows = T_pad * B
    x2 = x.reshape(rows, H)

    tile_m = min(tile_m, rows)
    tile_m = max(8, (tile_m // 8) * 8)                                 # sublane aligned
    rows_pad = int(pl.cdiv(rows, tile_m)) * tile_m
    if rows_pad != rows:
        x2 = jnp.pad(x2, ((0, rows_pad - rows), (0, 0)))

    gf, gb = pl.pallas_call(
        _proj_kernel,
        out_shape=(jax.ShapeDtypeStruct((rows_pad, G3), jnp.bfloat16),
                   jax.ShapeDtypeStruct((rows_pad, G3), jnp.bfloat16)),
        grid=(rows_pad // tile_m,),
        in_specs=[pl.BlockSpec((tile_m, H), lambda m: (m, 0)),
                  pl.BlockSpec((H, G6), lambda m: (0, 0)),
                  pl.BlockSpec((1, G6), lambda m: (0, 0))],
        out_specs=(pl.BlockSpec((tile_m, G3), lambda m: (m, 0)),
                   pl.BlockSpec((tile_m, G3), lambda m: (m, 0))),
        compiler_params=pltpu.CompilerParams(dimension_semantics=("parallel",)),
    )(x2, wih_cat, bih_cat)

    if rows_pad != rows:
        gf = gf[:rows]
        gb = gb[:rows]
    return gf.reshape(T_pad, B, G3), gb.reshape(T_pad, B, G3)


# ---------------------------------------------------------------------------
# Kernel 2: bidirectional GRU recurrence, time-tiled, fwd/bwd fused per step
# ---------------------------------------------------------------------------
def _bigru_kernel(len_ref, gf_ref, gb_ref, wcat_ref, bcat_ref, h0_ref,
                  out_f_ref, out_b_ref, hn_ref, hcat_sc):
    g = pl.program_id(0)
    nT = pl.num_programs(0)
    tile_T, B, G3 = gf_ref.shape
    H = G3 // 3

    @pl.when(g == 0)
    def _():
        hcat_sc[...] = h0_ref[...]                                     # (B, 2H) f32

    # Loop-invariant loads / broadcasts, hoisted out of the unrolled loop.
    wcat = wcat_ref[...]                                               # (2H, 6H) bf16
    bcat = jnp.broadcast_to(bcat_ref[...], (B, 2 * G3))                # (B, 6H) f32
    lens = len_ref[...]                                                # (B, 1) int32
    t0_f = g * tile_T                                                  # fwd global offset
    t0_b = (nT - 1 - g) * tile_T                                       # bwd global offset

    def gru_gates(gx, gh, h):
        r = jax.nn.sigmoid(gx[:, :H] + gh[:, :H])
        z = jax.nn.sigmoid(gx[:, H:2 * H] + gh[:, H:2 * H])
        n = jnp.tanh(gx[:, 2 * H:] + r * gh[:, 2 * H:])                # b_hn inside r*(.)
        return (1.0 - z) * n + z * h

    def body(i, carry):
        hf, hb = carry
        j = tile_T - 1 - i                    # backward local idx (its tile is reversed)

        gxf = gf_ref[i].astype(jnp.float32)                            # (B, 3H)
        gxb = gb_ref[j].astype(jnp.float32)

        # One block-diagonal hidden matmul for BOTH directions (K = 2H).
        h_cat = jnp.concatenate(
            [hf.astype(jnp.bfloat16), hb.astype(jnp.bfloat16)], axis=-1)
        gh = jnp.dot(h_cat, wcat, preferred_element_type=jnp.float32) + bcat  # (B,6H)

        hf_new = gru_gates(gxf, gh[:, :G3], hf)
        hb_new = gru_gates(gxb, gh[:, G3:], hb)

        # packed-sequence mask computed in-kernel (no (T,B,1) mask DMA streams)
        mf = ((t0_f + i) < lens).astype(jnp.float32)                   # (B, 1)
        mb = ((t0_b + j) < lens).astype(jnp.float32)
        out_f_ref[i] = mf * hf_new
        out_b_ref[j] = mb * hb_new
        return (hf + mf * (hf_new - hf), hb + mb * (hb_new - hb))

    h0 = hcat_sc[...]
    unroll = True if tile_T <= 16 else 8
    hf_fin, hb_fin = lax.fori_loop(0, tile_T, body, (h0[:, :H], h0[:, H:]),
                                   unroll=unroll)
    hcat_sc[...] = jnp.concatenate([hf_fin, hb_fin], axis=-1)

    @pl.when(g == nT - 1)
    def _():
        hn_ref[...] = hcat_sc[...]


def _bigru_recurrence(gates_f, gates_b, lengths, whh_cat, bhh_cat, h0_cat,
                      *, tile_T):
    T_pad, B, G3 = gates_f.shape
    H = G3 // 3
    nT = T_pad // tile_T
    return pl.pallas_call(
        _bigru_kernel,
        out_shape=(jax.ShapeDtypeStruct((T_pad, B, H), jnp.float32),   # out_fwd
                   jax.ShapeDtypeStruct((T_pad, B, H), jnp.float32),   # out_bwd
                   jax.ShapeDtypeStruct((B, 2 * H), jnp.float32)),     # h_n (cat)
        grid=(nT,),
        in_specs=[
            pl.BlockSpec((B, 1), lambda g: (0, 0)),                        # lengths
            pl.BlockSpec((tile_T, B, G3), lambda g: (g, 0, 0)),            # gates fwd bf16
            pl.BlockSpec((tile_T, B, G3), lambda g: (nT - 1 - g, 0, 0)),   # gates bwd bf16 (rev)
            pl.BlockSpec((2 * H, 2 * G3), lambda g: (0, 0)),               # blockdiag W_hh
            pl.BlockSpec((1, 2 * G3), lambda g: (0, 0)),                   # b_hh cat
            pl.BlockSpec((B, 2 * H), lambda g: (0, 0)),                    # h0 cat
        ],
        out_specs=(
            pl.BlockSpec((tile_T, B, H), lambda g: (g, 0, 0)),
            pl.BlockSpec((tile_T, B, H), lambda g: (nT - 1 - g, 0, 0)),
            pl.BlockSpec((B, 2 * H), lambda g: (0, 0)),
        ),
        scratch_shapes=[pltpu.VMEM((B, 2 * H), jnp.float32)],          # hidden carry f32
        compiler_params=pltpu.CompilerParams(dimension_semantics=("arbitrary",)),
    )(lengths, gates_f, gates_b, whh_cat, bhh_cat, h0_cat)


# ---------------------------------------------------------------------------
# Wrapper = EncoderRNN.forward
# ---------------------------------------------------------------------------
def _fuse_weights(params):
    H = params["whh_f"].shape[0]
    wih_cat = jnp.concatenate([params["wih_f"], params["wih_b"]], axis=1)     # (H, 6H) bf16
    bih_cat = jnp.concatenate([params["bih_f"], params["bih_b"]], axis=1)     # (1, 6H) f32
    zeros = jnp.zeros((H, 3 * H), jnp.bfloat16)
    whh_cat = jnp.concatenate(
        [jnp.concatenate([params["whh_f"], zeros], axis=1),
         jnp.concatenate([zeros, params["whh_b"]], axis=1)], axis=0)          # (2H, 6H) bf16
    bhh_cat = jnp.concatenate([params["bhh_f"], params["bhh_b"]], axis=1)     # (1, 6H) f32
    return wih_cat, bih_cat, whh_cat, bhh_cat


def encoder_rnn_forward(input_seq, input_lengths, params, hidden=None,
                        *, max_tile_T=32):
    T, B = input_seq.shape
    H = params["embedding"].shape[1]

    # Embedding lookup (gather) kept as XLA glue; cast to bf16 for the MXU.
    x = jnp.take(params["embedding"], input_seq, axis=0).astype(jnp.bfloat16)  # (T,B,H)

    # Adaptive time tile: whole sequence in one grid step when it is small.
    tile_T = T if T <= max_tile_T else max_tile_T
    T_pad = int(pl.cdiv(T, tile_T)) * tile_T
    if T_pad != T:
        x = jnp.pad(x, ((0, T_pad - T), (0, 0), (0, 0)))

    lengths = jnp.asarray(input_lengths, jnp.int32).reshape(B, 1)

    if hidden is None:
        hidden = jnp.zeros((2, B, H), jnp.float32)
    hidden = hidden.astype(jnp.float32)
    h0_cat = jnp.concatenate([hidden[0], hidden[1]], axis=-1)                  # (B, 2H)

    wih_cat, bih_cat, whh_cat, bhh_cat = _fuse_weights(params)

    # Hoisted input projections for both directions (one fused tiled GEMM).
    gates_f, gates_b = _input_projections(x, wih_cat, bih_cat)

    out_f, out_b, hn_cat = _bigru_recurrence(
        gates_f, gates_b, lengths, whh_cat, bhh_cat, h0_cat, tile_T=tile_T)

    t_out = int(max(input_lengths))          # pad_packed_sequence pads to longest seq
    outputs = out_f[:t_out] + out_b[:t_out]  # fwd + bwd sum (as in the module)
    h_n = jnp.stack([hn_cat[:, :H], hn_cat[:, H:]])
    return outputs, h_n


def init_params(key, vocab_size, hidden_size):
    H = hidden_size
    bound = 1.0 / math.sqrt(H)
    ks = jax.random.split(key, 9)

    def u(k, shape):
        return jax.random.uniform(k, shape, jnp.float32, -bound, bound)

    return dict(
        embedding=jax.random.normal(ks[0], (vocab_size, H), jnp.float32),
        # pre-transposed & gate-fused: columns ordered [r | z | n] (PyTorch order)
        wih_f=u(ks[1], (H, 3 * H)).astype(jnp.bfloat16),
        whh_f=u(ks[2], (H, 3 * H)).astype(jnp.bfloat16),
        bih_f=u(ks[3], (1, 3 * H)),
        bhh_f=u(ks[4], (1, 3 * H)),
        wih_b=u(ks[5], (H, 3 * H)).astype(jnp.bfloat16),
        whh_b=u(ks[6], (H, 3 * H)).astype(jnp.bfloat16),
        bih_b=u(ks[7], (1, 3 * H)),
        bhh_b=u(ks[8], (1, 3 * H)),
    )


# ----- pure-JAX reference (same math: bf16 gates, block-diag hidden matmul) -----
def reference_forward(input_seq, input_lengths, params, hidden=None):
    emb = params["embedding"]
    T, B = input_seq.shape
    H = emb.shape[1]
    x = jnp.take(emb, input_seq, axis=0).astype(jnp.bfloat16)
    wih_cat, bih_cat, whh_cat, bhh_cat = _fuse_weights(params)

    gates = (jnp.dot(x.reshape(T * B, H), wih_cat,
                     preferred_element_type=jnp.float32) + bih_cat)
    gates = gates.astype(jnp.bfloat16).reshape(T, B, 6 * H)            # bf16 storage
    gates_f = gates[:, :, :3 * H]
    gates_b = gates[:, :, 3 * H:]

    lengths = jnp.asarray(input_lengths, jnp.int32).reshape(1, B, 1)
    mask = (jnp.arange(T).reshape(T, 1, 1) < lengths).astype(jnp.float32)

    if hidden is None:
        hf = jnp.zeros((B, H), jnp.float32)
        hb = jnp.zeros((B, H), jnp.float32)
    else:
        hf, hb = hidden[0].astype(jnp.float32), hidden[1].astype(jnp.float32)

    def cell(gx_bf16, gh, h):
        gx = gx_bf16.astype(jnp.float32)
        r = jax.nn.sigmoid(gx[:, :H] + gh[:, :H])
        z = jax.nn.sigmoid(gx[:, H:2 * H] + gh[:, H:2 * H])
        n = jnp.tanh(gx[:, 2 * H:] + r * gh[:, 2 * H:])
        return (1.0 - z) * n + z * h

    out_f = [None] * T
    out_b = [None] * T
    for s in range(T):
        t_f, t_b = s, T - 1 - s
        h_cat = jnp.concatenate([hf, hb], axis=-1).astype(jnp.bfloat16)
        gh = jnp.dot(h_cat, whh_cat, preferred_element_type=jnp.float32) + bhh_cat
        hf_new = cell(gates_f[t_f], gh[:, :3 * H], hf)
        hb_new = cell(gates_b[t_b], gh[:, 3 * H:], hb)
        mf, mb = mask[t_f], mask[t_b]
        out_f[t_f] = mf * hf_new
        out_b[t_b] = mb * hb_new
        hf = hf + mf * (hf_new - hf)
        hb = hb + mb * (hb_new - hb)

    out = jnp.stack([out_f[t] + out_b[t] for t in range(T)])
    t_out = int(max(input_lengths))
    return out[:t_out], jnp.stack([hf, hb])


if __name__ == "__main__":
    # Small but TPU-friendly shapes: H multiple of 128 (lane-dense), B = 8
    # (full sublane), T = 10 -> whole recurrence runs in a single grid step.
    T, B, H, V = 10, 8, 128, 50
    key = jax.random.PRNGKey(0)
    k_params, k_seq = jax.random.split(key)
    params = init_params(k_params, V, H)

    input_seq = jax.random.randint(k_seq, (T, B), 0, V, dtype=jnp.int32)
    input_lengths = [10, 9, 8, 8, 7, 5, 3, 2]   # sorted descending (pack_padded_sequence)

    out, h_n = encoder_rnn_forward(input_seq, input_lengths, params)
    out = jax.block_until_ready(out)
    h_n = jax.block_until_ready(h_n)

    assert out.shape == (max(input_lengths), B, H)
    assert h_n.shape == (2, B, H)

    ref_out, ref_hn = reference_forward(input_seq, input_lengths, params)
    np.testing.assert_allclose(np.asarray(out), np.asarray(ref_out), rtol=1e-3, atol=1e-3)
    np.testing.assert_allclose(np.asarray(h_n), np.asarray(ref_hn), rtol=1e-3, atol=1e-3)

    print("KERNEL_OK")
</pallas_src>

<mosaic_0001>
module attributes {stable_mosaic.version = 11 : i64} {
  func.func @_proj_kernel(%arg0: i32, %arg1: memref<80x128xbf16, #tpu.memory_space<vmem>>, %arg2: memref<128x768xbf16, #tpu.memory_space<vmem>>, %arg3: memref<1x768xf32, #tpu.memory_space<vmem>>, %arg4: memref<80x384xbf16, #tpu.memory_space<vmem>>, %arg5: memref<80x384xbf16, #tpu.memory_space<vmem>>) attributes {dimension_semantics = [#tpu.dimension_semantics<parallel>], iteration_bounds = array<i64: 1>, scalar_prefetch = 0 : i64, scratch_operands = 0 : i64, tpu.core_type = #tpu.core_type<tc>, window_params = [{transform_indices = @transform_0, window_bounds = array<i64: 80, 128>}, {pipeline_mode = #tpu.pipeline_mode<synchronous>, transform_indices = @transform_1, window_bounds = array<i64: 128, 768>}, {pipeline_mode = #tpu.pipeline_mode<synchronous>, transform_indices = @transform_2, window_bounds = array<i64: 1, 768>}, {transform_indices = @transform_3, window_bounds = array<i64: 80, 384>}, {transform_indices = @transform_4, window_bounds = array<i64: 80, 384>}]} {
    %c0 = arith.constant 0 : index
    %c0_0 = arith.constant 0 : index
    %0 = vector.load %arg1[%c0, %c0_0] : memref<80x128xbf16, #tpu.memory_space<vmem>>, vector<80x128xbf16>
    %c0_1 = arith.constant 0 : index
    %c0_2 = arith.constant 0 : index
    %1 = vector.load %arg2[%c0_1, %c0_2] : memref<128x768xbf16, #tpu.memory_space<vmem>>, vector<128x768xbf16>
    %cst = arith.constant dense<0.000000e+00> : vector<80x768xf32>
    %2 = tpu.matmul %0, %1, %cst {dimension_numbers = #tpu.dot_dimension_numbers<[1], [0], [0], [1], [0, 0, 1, 1], [], []>} : vector<80x128xbf16>, vector<128x768xbf16>, vector<80x768xf32> -> vector<80x768xf32>
    %c0_3 = arith.constant 0 : index
    %c0_4 = arith.constant 0 : index
    %3 = vector.load %arg3[%c0_3, %c0_4] : memref<1x768xf32, #tpu.memory_space<vmem>>, vector<1x768xf32>
    %4 = vector.broadcast %3 : vector<1x768xf32> to vector<80x768xf32>
    %5 = arith.addf %2, %4 : vector<80x768xf32>
    %6 = arith.truncf %5 : vector<80x768xf32> to vector<80x768xbf16>
    %7 = vector.extract_strided_slice %6 {offsets = [0, 0], sizes = [80, 384], strides = [1, 1]} : vector<80x768xbf16> to vector<80x384xbf16>
    %c0_5 = arith.constant 0 : index
    %c0_6 = arith.constant 0 : index
    %8 = vector.load %arg4[%c0_5, %c0_6] : memref<80x384xbf16, #tpu.memory_space<vmem>>, vector<80x384xbf16>
    tpu.vector_store %arg4[%c0_5, %c0_6], %7 {strides = array<i32>} : memref<80x384xbf16, #tpu.memory_space<vmem>>, vector<80x384xbf16>,
    %9 = vector.extract_strided_slice %6 {offsets = [0, 384], sizes = [80, 384], strides = [1, 1]} : vector<80x768xbf16> to vector<80x384xbf16>
    %c0_7 = arith.constant 0 : index
    %c0_8 = arith.constant 0 : index
    %10 = vector.load %arg5[%c0_7, %c0_8] : memref<80x384xbf16, #tpu.memory_space<vmem>>, vector<80x384xbf16>
    tpu.vector_store %arg5[%c0_7, %c0_8], %9 {strides = array<i32>} : memref<80x384xbf16, #tpu.memory_space<vmem>>, vector<80x384xbf16>,
    return
  }
  func.func @transform_0(%arg0: i32) -> (i32, i32) {
    %c0_i32 = arith.constant 0 : i32
    %c0_i32_0 = arith.constant 0 : i32
    return %arg0, %c0_i32 : i32, i32
  }
  func.func @transform_1(%arg0: i32) -> (i32, i32) {
    %c0_i32 = arith.constant 0 : i32
    %c0_i32_0 = arith.constant 0 : i32
    %c0_i32_1 = arith.constant 0 : i32
    return %c0_i32, %c0_i32_0 : i32, i32
  }
  func.func @transform_2(%arg0: i32) -> (i32, i32) {
    %c0_i32 = arith.constant 0 : i32
    %c0_i32_0 = arith.constant 0 : i32
    %c0_i32_1 = arith.constant 0 : i32
    return %c0_i32, %c0_i32_0 : i32, i32
  }
  func.func @transform_3(%arg0: i32) -> (i32, i32) {
    %c0_i32 = arith.constant 0 : i32
    %c0_i32_0 = arith.constant 0 : i32
    return %arg0, %c0_i32 : i32, i32
  }
  func.func @transform_4(%arg0: i32) -> (i32, i32) {
    %c0_i32 = arith.constant 0 : i32
    %c0_i32_0 = arith.constant 0 : i32
    return %arg0, %c0_i32 : i32, i32
  }
}

</mosaic_0001>

<llo_original>
// kernel: tpu_custom_call.1
$region0: #{tpu_custom_call.1}
  #allocation0 [shape = 'u32[]', space=smem, size = 0x4, offset = 0x4, fixed_abs, tag = 'smem constant byte address 0x4 - core index']
  #allocation1 [shape = 'u32[144,128]{1,0:T(1,128)}', space=vmem, size = 0x12000, scoped, tag = 'internal scratch']
  %s0 = inlined_call_operand.hbm [shape: bf16[80,128], index: 0, kind: input, shape index: {}]
  %s1 = inlined_call_operand.hbm [shape: bf16[128,768], index: 1, kind: input, shape index: {}]
  %s2 = inlined_call_operand.vmem [shape: f32[1,768], index: 2, kind: input, shape index: {}]
  %s3 = inlined_call_operand.hbm [shape: bf16[80,384], index: 3, kind: output, shape index: {0}]
  %s4 = inlined_call_operand.hbm [shape: bf16[80,384], index: 4, kind: output, shape index: {1}]
  %5 = xla_tuple %s3, %s4
  %s6 = sld [smem:[#allocation0]]
  $region38: #{tpu_custom_call.1} parent=0
    _
  %s8 = ssub.s32 1, %s6
  %s9 = scalar_select 0, %s8, %s6
  $region1: #{tpu_custom_call.1} parent=0
    #allocation2 [shape = 'u8[20480]{0}', space=vmem, size = 0x5000, scoped, tag = 'input window, operand 0, single buffered']
    #allocation3 [shape = 's32[1]{0}', space=sflag, size = 0x4, scoped, tag = 'scoped memory for tpu_custom_call.1']
    #allocation4 [shape = 's32[1]{0}', space=sflag, size = 0x4, scoped, tag = 'scoped memory for tpu_custom_call.1']
    #allocation5 [shape = 'u8[196608]{0}', space=vmem, size = 0x30000, scoped, tag = 'input window, operand 1, single buffered']
    #allocation6 [shape = 's32[1]{0}', space=sflag, size = 0x4, scoped, tag = 'scoped memory for tpu_custom_call.1']
    #allocation7 [shape = 'u8[61440]{0}', space=vmem, size = 0xf000, scoped, tag = 'output window, operand 0, single buffered']
    #allocation8 [shape = 'u8[61440]{0}', space=vmem, size = 0xf000, scoped, tag = 'output window, operand 1, single buffered']
    #allocation9 [shape = 's32[1]{0}', space=sflag, size = 0x4, scoped, tag = 'scoped memory for tpu_custom_call.1']
    %10 = vsyncpa [#allocation3], 0
    %11 = vsyncpa [#allocation6], 0
    %12 = vsyncpa [#allocation4], 0
    %13 = vsyncpa [#allocation9], 0
    // Predicated region
    $region2: #{tpu_custom_call.1} parent=1 // pred_check
      _
    $region3: #{tpu_custom_call.1} parent=1 // pred_check_branch
      %15 = sbr.rel (0) target = $region5
    $region4: #{tpu_custom_call.1} parent=1 // pred_region
      %s17 = ssub.s32 640, 640
      %18 = vsyncadd [#allocation3], %s17
      %s19 = sshll.u32 [#allocation2], 4
      %s20 = int_to_ptr.vmem [resolvable:$true] %s19
      %25 = dma.hbm_to_vmem [thread:$0]  %s0, 640, %s20, [#allocation3], 64, 64, 4
    $region5: #{tpu_custom_call.1} parent=1 // pred_fallthru
      _
    // Predicated region
    $region6: #{tpu_custom_call.1} parent=1 // pred_check
      _
    $region7: #{tpu_custom_call.1} parent=1 // pred_check_branch
      %27 = sbr.rel (0) target = $region9
    $region8: #{tpu_custom_call.1} parent=1 // pred_region
      %s29 = ssub.s32 6144, 6144
      %30 = vsyncadd [#allocation6], %s29
      %s31 = sshll.u32 [#allocation5], 4
      %s32 = int_to_ptr.vmem [resolvable:$true] %s31
      %37 = dma.hbm_to_vmem [thread:$0]  %s1, 6144, %s32, [#allocation6], 384, 384, 24
    $region9: #{tpu_custom_call.1} parent=1 // pred_fallthru
      _
    // Predicated region
    $region10: #{tpu_custom_call.1} parent=1 // pred_check
      _
    $region11: #{tpu_custom_call.1} parent=1 // pred_check_branch
      %39 = sbr.rel (0) target = $region13
    $region12: #{tpu_custom_call.1} parent=1 // pred_region
      _
    $region13: #{tpu_custom_call.1} parent=1 // pred_fallthru
      _
    // Predicated region
    $region14: #{tpu_custom_call.1} parent=1 // pred_check
      _
    $region15: #{tpu_custom_call.1} parent=1 // pred_check_branch
      %41 = sbr.rel (0) target = $region17
    $region16: #{tpu_custom_call.1} parent=1 // pred_region
      %42 = dma.done [#allocation3], 640
    $region17: #{tpu_custom_call.1} parent=1 // pred_fallthru
      _
    // Predicated region
    $region18: #{tpu_custom_call.1} parent=1 // pred_check
      _
    $region19: #{tpu_custom_call.1} parent=1 // pred_check_branch
      %44 = sbr.rel (0) target = $region21
    $region20: #{tpu_custom_call.1} parent=1 // pred_region
      %45 = dma.done [#allocation6], 6144
    $region21: #{tpu_custom_call.1} parent=1 // pred_fallthru
      _
    %v47 = vld [vmem:[#allocation2] sm:$0xf]
    %v48 = vld [vmem:[#allocation2 + $0x4] sm:$0xf]
    %v49 = vld [vmem:[#allocation2 + $0x8] sm:$0xf]
    %v50 = vld [vmem:[#allocation2 + $0xc] sm:$0xf]
    %v51 = vld [vmem:[#allocation2 + $0x10] sm:$0xf]
    %v52 = vld [vmem:[#allocation2 + $0x14] sm:$0xf]
    %v53 = vld [vmem:[#allocation2 + $0x18] sm:$0xf]
    %v54 = vld [vmem:[#allocation2 + $0x1c] sm:$0xf]
    %v55 = vld [vmem:[#allocation2 + $0x20] sm:$0xf]
    %v56 = vld [vmem:[#allocation2 + $0x24] sm:$0xf]
    %v57 = vld [vmem:[#allocation5] sm:$0xff]
    %v58 = vld [vmem:[#allocation5 + $0x8] sm:$0xff]
    %v59 = vld [vmem:[#allocation5 + $0x10] sm:$0xff]
    %v60 = vld [vmem:[#allocation5 + $0x18] sm:$0xff]
    %v61 = vld [vmem:[#allocation5 + $0x20] sm:$0xff]
    %v62 = vld [vmem:[#allocation5 + $0x28] sm:$0xff]
    %v63 = vld [vmem:[#allocation5 + $0x30] sm:$0xff]
    %v64 = vld [vmem:[#allocation5 + $0x38] sm:$0xff]
    %v65 = vld [vmem:[#allocation5 + $0x40] sm:$0xff]
    %v66 = vld [vmem:[#allocation5 + $0x48] sm:$0xff]
    %v67 = vld [vmem:[#allocation5 + $0x50] sm:$0xff]
    %v68 = vld [vmem:[#allocation5 + $0x58] sm:$0xff]
    %v69 = vld [vmem:[#allocation5 + $0x60] sm:$0xff]
    %v70 = vld [vmem:[#allocation5 + $0x68] sm:$0xff]
    %v71 = vld [vmem:[#allocation5 + $0x70] sm:$0xff]
    %v72 = vld [vmem:[#allocation5 + $0x78] sm:$0xff]
    %v73 = vld [vmem:[#allocation5 + $0x80] sm:$0xff]
    %v74 = vld [vmem:[#allocation5 + $0x88] sm:$0xff]
    %v75 = vld [vmem:[#allocation5 + $0x90] sm:$0xff]
    %v76 = vld [vmem:[#allocation5 + $0x98] sm:$0xff]
    %v77 = vld [vmem:[#allocation5 + $0xa0] sm:$0xff]
    %v78 = vld [vmem:[#allocation5 + $0xa8] sm:$0xff]
    %v79 = vld [vmem:[#allocation5 + $0xb0] sm:$0xff]
    %v80 = vld [vmem:[#allocation5 + $0xb8] sm:$0xff]
    %v81 = vld [vmem:[#allocation5 + $0xc0] sm:$0xff]
    %v82 = vld [vmem:[#allocation5 + $0xc8] sm:$0xff]
    %v83 = vld [vmem:[#allocation5 + $0xd0] sm:$0xff]
    %v84 = vld [vmem:[#allocation5 + $0xd8] sm:$0xff]
    %v85 = vld [vmem:[#allocation5 + $0xe0] sm:$0xff]
    %v86 = vld [vmem:[#allocation5 + $0xe8] sm:$0xff]
    %v87 = vld [vmem:[#allocation5 + $0xf0] sm:$0xff]
    %v88 = vld [vmem:[#allocation5 + $0xf8] sm:$0xff]
    %v89 = vld [vmem:[#allocation5 + $0x100] sm:$0xff]
    %v90 = vld [vmem:[#allocation5 + $0x108] sm:$0xff]
    %v91 = vld [vmem:[#allocation5 + $0x110] sm:$0xff]
    %v92 = vld [vmem:[#allocation5 + $0x118] sm:$0xff]
    %v93 = vld [vmem:[#allocation5 + $0x120] sm:$0xff]
    %v94 = vld [vmem:[#allocation5 + $0x128] sm:$0xff]
    %v95 = vld [vmem:[#allocation5 + $0x130] sm:$0xff]
    %v96 = vld [vmem:[#allocation5 + $0x138] sm:$0xff]
    %v97 = vld [vmem:[#allocation5 + $0x140] sm:$0xff]
    %v98 = vld [vmem:[#allocation5 + $0x148] sm:$0xff]
    %v99 = vld [vmem:[#allocation5 + $0x150] sm:$0xff]
    %v100 = vld [vmem:[#allocation5 + $0x158] sm:$0xff]
    %v101 = vld [vmem:[#allocation5 + $0x160] sm:$0xff]
    %v102 = vld [vmem:[#allocation5 + $0x168] sm:$0xff]
    %v103 = vld [vmem:[#allocation5 + $0x170] sm:$0xff]
    %v104 = vld [vmem:[#allocation5 + $0x178] sm:$0xff]
    %v105 = vld [vmem:[%s2] sm:$0x3f]
    %v107 = vlaneseq
    %v108 = vshrl.u32 %v107, 7
    %v109 = vsub.s32 0, %v108
    %v110 = vrot.slane %v105, %v109
    %v111 = vlaneseq
    %v112 = vshrl.u32 %v111, 7
    %v113 = vsub.s32 1, %v112
    %v114 = vrot.slane %v105, %v113
    %v115 = vlaneseq
    %v116 = vshrl.u32 %v115, 7
    %v117 = vsub.s32 2, %v116
    %v118 = vrot.slane %v105, %v117
    %v119 = vlaneseq
    %v120 = vshrl.u32 %v119, 7
    %v121 = vsub.s32 3, %v120
    %v122 = vrot.slane %v105, %v121
    %v123 = vlaneseq
    %v124 = vshrl.u32 %v123, 7
    %v125 = vsub.s32 4, %v124
    %v126 = vrot.slane %v105, %v125
    %v127 = vlaneseq
    %v128 = vshrl.u32 %v127, 7
    %v129 = vsub.s32 5, %v128
    %v130 = vrot.slane %v105, %v129
    %v147 = vunpack.c.l.b16 %v47
    %v148 = vunpack.c.l.b16 %v48
    %v149 = vunpack.c.l.b16 %v49
    %v150 = vunpack.c.l.b16 %v50
    %v151 = vunpack.c.l.b16 %v51
    %v152 = vunpack.c.l.b16 %v52
    %v153 = vunpack.c.l.b16 %v53
    %v154 = vunpack.c.l.b16 %v54
    %v155 = vunpack.c.l.b16 %v55
    %v156 = vunpack.c.l.b16 %v56
    %v157 = vpack.c.b16 %v148, %v147
    %v158 = vpack.c.b16 %v150, %v149
    %v159 = vpack.c.b16 %v152, %v151
    %v160 = vpack.c.b16 %v154, %v153
    %v161 = vpack.c.b16 %v156, %v155
    %v215 = vunpack.c.l.b16 %v57
    %v216 = vunpack.c.h.b16 %v57
    %v217 = vunpack.c.l.b16 %v58
    %v218 = vunpack.c.h.b16 %v58
    %v219 = vunpack.c.l.b16 %v59
    %v220 = vunpack.c.h.b16 %v59
    %v221 = vunpack.c.l.b16 %v60
    %v222 = vunpack.c.h.b16 %v60
    %v223 = vunpack.c.l.b16 %v61
    %v224 = vunpack.c.h.b16 %v61
    %v225 = vunpack.c.l.b16 %v62
    %v226 = vunpack.c.h.b16 %v62
    %v227 = vunpack.c.l.b16 %v63
    %v228 = vunpack.c.h.b16 %v63
    %v229 = vunpack.c.l.b16 %v64
    %v230 = vunpack.c.h.b16 %v64
    %v231 = vunpack.c.l.b16 %v65
    %v232 = vunpack.c.h.b16 %v65
    %v233 = vunpack.c.l.b16 %v66
    %v234 = vunpack.c.h.b16 %v66
    %v235 = vunpack.c.l.b16 %v67
    %v236 = vunpack.c.h.b16 %v67
    %v237 = vunpack.c.l.b16 %v68
    %v238 = vunpack.c.h.b16 %v68
    %v239 = vunpack.c.l.b16 %v69
    %v240 = vunpack.c.h.b16 %v69
    %v241 = vunpack.c.l.b16 %v70
    %v242 = vunpack.c.h.b16 %v70
    %v243 = vunpack.c.l.b16 %v71
    %v244 = vunpack.c.h.b16 %v71
    %v245 = vunpack.c.l.b16 %v72
    %v246 = vunpack.c.h.b16 %v72
    %v247 = vunpack.c.l.b16 %v73
    %v248 = vunpack.c.h.b16 %v73
    %v249 = vunpack.c.l.b16 %v74
    %v250 = vunpack.c.h.b16 %v74
    %v251 = vunpack.c.l.b16 %v75
    %v252 = vunpack.c.h.b16 %v75
    %v253 = vunpack.c.l.b16 %v76
    %v254 = vunpack.c.h.b16 %v76
    %v255 = vunpack.c.l.b16 %v77
    %v256 = vunpack.c.h.b16 %v77
    %v257 = vunpack.c.l.b16 %v78
    %v258 = vunpack.c.h.b16 %v78
    %v259 = vunpack.c.l.b16 %v79
    %v260 = vunpack.c.h.b16 %v79
    %v261 = vunpack.c.l.b16 %v80
    %v262 = vunpack.c.h.b16 %v80
    %v263 = vunpack.c.l.b16 %v81
    %v264 = vunpack.c.h.b16 %v81
    %v265 = vunpack.c.l.b16 %v82
    %v266 = vunpack.c.h.b16 %v82
    %v267 = vunpack.c.l.b16 %v83
    %v268 = vunpack.c.h.b16 %v83
    %v269 = vunpack.c.l.b16 %v84
    %v270 = vunpack.c.h.b16 %v84
    %v271 = vunpack.c.l.b16 %v85
    %v272 = vunpack.c.h.b16 %v85
    %v273 = vunpack.c.l.b16 %v86
    %v274 = vunpack.c.h.b16 %v86
    %v275 = vunpack.c.l.b16 %v87
    %v276 = vunpack.c.h.b16 %v87
    %v277 = vunpack.c.l.b16 %v88
    %v278 = vunpack.c.h.b16 %v88
    %v279 = vunpack.c.l.b16 %v89
    %v280 = vunpack.c.h.b16 %v89
    %v281 = vunpack.c.l.b16 %v90
    %v282 = vunpack.c.h.b16 %v90
    %v283 = vunpack.c.l.b16 %v91
    %v284 = vunpack.c.h.b16 %v91
    %v285 = vunpack.c.l.b16 %v92
    %v286 = vunpack.c.h.b16 %v92
    %v287 = vunpack.c.l.b16 %v93
    %v288 = vunpack.c.h.b16 %v93
    %v289 = vunpack.c.l.b16 %v94
    %v290 = vunpack.c.h.b16 %v94
    %v291 = vunpack.c.l.b16 %v95
    %v292 = vunpack.c.h.b16 %v95
    %v293 = vunpack.c.l.b16 %v96
    %v294 = vunpack.c.h.b16 %v96
    %v295 = vunpack.c.l.b16 %v97
    %v296 = vunpack.c.h.b16 %v97
    %v297 = vunpack.c.l.b16 %v98
    %v298 = vunpack.c.h.b16 %v98
    %v299 = vunpack.c.l.b16 %v99
    %v300 = vunpack.c.h.b16 %v99
    %v301 = vunpack.c.l.b16 %v100
    %v302 = vunpack.c.h.b16 %v100
    %v303 = vunpack.c.l.b16 %v101
    %v304 = vunpack.c.h.b16 %v101
    %v305 = vunpack.c.l.b16 %v102
    %v306 = vunpack.c.h.b16 %v102
    %v307 = vunpack.c.l.b16 %v103
    %v308 = vunpack.c.h.b16 %v103
    %v309 = vunpack.c.l.b16 %v104
    %v310 = vunpack.c.h.b16 %v104
    %v311 = vpack.c.b16 %v221, %v215
    %v312 = vpack.c.b16 %v222, %v216
    %v313 = vpack.c.b16 %v223, %v217
    %v314 = vpack.c.b16 %v224, %v218
    %v315 = vpack.c.b16 %v225, %v219
    %v316 = vpack.c.b16 %v226, %v220
    %v317 = vpack.c.b16 %v233, %v227
    %v318 = vpack.c.b16 %v234, %v228
    %v319 = vpack.c.b16 %v235, %v229
    %v320 = vpack.c.b16 %v236, %v230
    %v321 = vpack.c.b16 %v237, %v231
    %v322 = vpack.c.b16 %v238, %v232
    %v323 = vpack.c.b16 %v245, %v239
    %v324 = vpack.c.b16 %v246, %v240
    %v325 = vpack.c.b16 %v247, %v241
    %v326 = vpack.c.b16 %v248, %v242
    %v327 = vpack.c.b16 %v249, %v243
    %v328 = vpack.c.b16 %v250, %v244
    %v329 = vpack.c.b16 %v257, %v251
    %v330 = vpack.c.b16 %v258, %v252
    %v331 = vpack.c.b16 %v259, %v253
    %v332 = vpack.c.b16 %v260, %v254
    %v333 = vpack.c.b16 %v261, %v255
    %v334 = vpack.c.b16 %v262, %v256
    %v335 = vpack.c.b16 %v269, %v263
    %v336 = vpack.c.b16 %v270, %v264
    %v337 = vpack.c.b16 %v271, %v265
    %v338 = vpack.c.b16 %v272, %v266
    %v339 = vpack.c.b16 %v273, %v267
    %v340 = vpack.c.b16 %v274, %v268
    %v341 = vpack.c.b16 %v281, %v275
    %v342 = vpack.c.b16 %v282, %v276
    %v343 = vpack.c.b16 %v283, %v277
    %v344 = vpack.c.b16 %v284, %v278
    %v345 = vpack.c.b16 %v285, %v279
    %v346 = vpack.c.b16 %v286, %v280
    %v347 = vpack.c.b16 %v293, %v287
    %v348 = vpack.c.b16 %v294, %v288
    %v349 = vpack.c.b16 %v295, %v289
    %v350 = vpack.c.b16 %v296, %v290
    %v351 = vpack.c.b16 %v297, %v291
    %v352 = vpack.c.b16 %v298, %v292
    %v353 = vpack.c.b16 %v305, %v299
    %v354 = vpack.c.b16 %v306, %v300
    %v355 = vpack.c.b16 %v307, %v301
    %v356 = vpack.c.b16 %v308, %v302
    %v357 = vpack.c.b16 %v309, %v303
    %v358 = vpack.c.b16 %v310, %v304
    %407 = vmatprep.subr.bf16.mxu0 %v312
    %408 = vmatpush1.bf16.msra.mxu0 %v311
    %409 = vmatprep.subr.bf16.mxu0 %v318
    %410 = vmatpush1.bf16.msra.mxu0 %v317
    %411 = vmatprep.subr.bf16.mxu0 %v324
    %412 = vmatpush1.bf16.msra.mxu0 %v323
    %413 = vmatprep.subr.bf16.mxu0 %v330
    %414 = vmatpush1.bf16.msra.mxu0 %v329
    %415 = vmatprep.subr.bf16.mxu0 %v336
    %416 = vmatpush1.bf16.msra.mxu0 %v335
    %417 = vmatprep.subr.bf16.mxu0 %v342
    %418 = vmatpush1.bf16.msra.mxu0 %v341
    %419 = vmatprep.subr.bf16.mxu0 %v348
    %420 = vmatpush1.bf16.msra.mxu0 %v347
    %421 = vmatprep.subr.bf16.mxu0 %v354
    %422 = vmatpush1.bf16.msra.mxu0 %v353
    %423 = vmatprep.subr.bf16.mxu0 0
    %424 = vmatpush1.bf16.msra.mxu0 0
    %425 = vmatprep.subr.bf16.mxu0 0
    %426 = vmatpush1.bf16.msra.mxu0 0
    %427 = vmatprep.subr.bf16.mxu0 0
    %428 = vmatpush1.bf16.msra.mxu0 0
    %429 = vmatprep.subr.bf16.mxu0 0
    %430 = vmatpush1.bf16.msra.mxu0 0
    %431 = vmatprep.subr.bf16.mxu0 0
    %432 = vmatpush1.bf16.msra.mxu0 0
    %433 = vmatprep.subr.bf16.mxu0 0
    %434 = vmatpush1.bf16.msra.mxu0 0
    %435 = vmatprep.subr.bf16.mxu0 0
    %436 = vmatpush1.bf16.msra.mxu0 0
    %437 = vmatprep.subr.bf16.mxu0 0
    %438 = vmatpush1.bf16.msra.mxu0 0
    %439 = vmatprep.mubr.bf16.mxu0 0
    %440 = vmatmul.mubr.bf16.gmra.mrb[0].mxu0 %v157
    %v441 = vpop.f32.mrb[0].mxu0
    %v442 = vadd.f32 %v110, %v441
    %v443 = vpop.f32.mrb[0].mxu0
    %v444 = vadd.f32 %v114, %v443
    %v445 = vpop.f32.mrb[0].mxu0
    %v446 = vadd.f32 %v110, %v445
    %v447 = vpop.f32.mrb[0].mxu0
    %v448 = vadd.f32 %v114, %v447
    %449 = vmatprep.mubr.bf16.mxu0 0
    %450 = vmatmul.mubr.bf16.gmra.mrb[0].mxu0 %v158
    %v451 = vpop.f32.mrb[0].mxu0
    %v452 = vadd.f32 %v110, %v451
    %v453 = vpop.f32.mrb[0].mxu0
    %v454 = vadd.f32 %v114, %v453
    %v455 = vpop.f32.mrb[0].mxu0
    %v456 = vadd.f32 %v110, %v455
    %v457 = vpop.f32.mrb[0].mxu0
    %v458 = vadd.f32 %v114, %v457
    %459 = vmatprep.mubr.bf16.mxu0 0
    %460 = vmatmul.mubr.bf16.gmra.mrb[0].mxu0 %v159
    %v461 = vpop.f32.mrb[0].mxu0
    %v462 = vadd.f32 %v110, %v461
    %v463 = vpop.f32.mrb[0].mxu0
    %v464 = vadd.f32 %v114, %v463
    %v465 = vpop.f32.mrb[0].mxu0
    %v466 = vadd.f32 %v110, %v465
    %v467 = vpop.f32.mrb[0].mxu0
    %v468 = vadd.f32 %v114, %v467
    %469 = vmatprep.mubr.bf16.mxu0 0
    %470 = vmatmul.mubr.bf16.gmra.mrb[0].mxu0 %v160
    %v471 = vpop.f32.mrb[0].mxu0
    %v472 = vadd.f32 %v110, %v471
    %v473 = vpop.f32.mrb[0].mxu0
    %v474 = vadd.f32 %v114, %v473
    %v475 = vpop.f32.mrb[0].mxu0
    %v476 = vadd.f32 %v110, %v475
    %v477 = vpop.f32.mrb[0].mxu0
    %v478 = vadd.f32 %v114, %v477
    %479 = vmatprep.mubr.bf16.mxu0 0
    %480 = vmatmul.mubr.bf16.gmra.mrb[0].mxu0 %v161
    %v481 = vpop.f32.mrb[0].mxu0
    %v482 = vadd.f32 %v110, %v481
    %v483 = vpop.f32.mrb[0].mxu0
    %v484 = vadd.f32 %v114, %v483
    %v485 = vpop.f32.mrb[0].mxu0
    %v486 = vadd.f32 %v110, %v485
    %v487 = vpop.f32.mrb[0].mxu0
    %v488 = vadd.f32 %v114, %v487
    %489 = vdwg.mxu0
    %490 = vmatprep.subr.bf16.mxu0 %v314
    %491 = vmatpush1.bf16.msra.mxu0 %v313
    %492 = vmatprep.subr.bf16.mxu0 %v320
    %493 = vmatpush1.bf16.msra.mxu0 %v319
    %494 = vmatprep.subr.bf16.mxu0 %v326
    %495 = vmatpush1.bf16.msra.mxu0 %v325
    %496 = vmatprep.subr.bf16.mxu0 %v332
    %497 = vmatpush1.bf16.msra.mxu0 %v331
    %498 = vmatprep.subr.bf16.mxu0 %v338
    %499 = vmatpush1.bf16.msra.mxu0 %v337
    %500 = vmatprep.subr.bf16.mxu0 %v344
    %501 = vmatpush1.bf16.msra.mxu0 %v343
    %502 = vmatprep.subr.bf16.mxu0 %v350
    %503 = vmatpush1.bf16.msra.mxu0 %v349
    %504 = vmatprep.subr.bf16.mxu0 %v356
    %505 = vmatpush1.bf16.msra.mxu0 %v355
    %506 = vmatprep.subr.bf16.mxu0 0
    %507 = vmatpush1.bf16.msra.mxu0 0
    %508 = vmatprep.subr.bf16.mxu0 0
    %509 = vmatpush1.bf16.msra.mxu0 0
    %510 = vmatprep.subr.bf16.mxu0 0
    %511 = vmatpush1.bf16.msra.mxu0 0
    %512 = vmatprep.subr.bf16.mxu0 0
    %513 = vmatpush1.bf16.msra.mxu0 0
    %514 = vmatprep.subr.bf16.mxu0 0
    %515 = vmatpush1.bf16.msra.mxu0 0
    %516 = vmatprep.subr.bf16.mxu0 0
    %517 = vmatpush1.bf16.msra.mxu0 0
    %518 = vmatprep.subr.bf16.mxu0 0
    %519 = vmatpush1.bf16.msra.mxu0 0
    %520 = vmatprep.subr.bf16.mxu0 0
    %521 = vmatpush1.bf16.msra.mxu0 0
    %522 = vmatprep.mubr.bf16.mxu0 0
    %523 = vmatmul.mubr.bf16.gmra.mrb[0].mxu0 %v157
    %v524 = vpop.f32.mrb[0].mxu0
    %v525 = vadd.f32 %v118, %v524
    %v526 = vpop.f32.mrb[0].mxu0
    %v527 = vadd.f32 %v122, %v526
    %v528 = vpop.f32.mrb[0].mxu0
    %v529 = vadd.f32 %v118, %v528
    %v530 = vpop.f32.mrb[0].mxu0
    %v531 = vadd.f32 %v122, %v530
    %532 = vmatprep.mubr.bf16.mxu0 0
    %533 = vmatmul.mubr.bf16.gmra.mrb[0].mxu0 %v158
    %v534 = vpop.f32.mrb[0].mxu0
    %v535 = vadd.f32 %v118, %v534
    %v536 = vpop.f32.mrb[0].mxu0
    %v537 = vadd.f32 %v122, %v536
    %v538 = vpop.f32.mrb[0].mxu0
    %v539 = vadd.f32 %v118, %v538
    %v540 = vpop.f32.mrb[0].mxu0
    %v541 = vadd.f32 %v122, %v540
    %542 = vmatprep.mubr.bf16.mxu0 0
    %543 = vmatmul.mubr.bf16.gmra.mrb[0].mxu0 %v159
    %v544 = vpop.f32.mrb[0].mxu0
    %v545 = vadd.f32 %v118, %v544
    %v546 = vpop.f32.mrb[0].mxu0
    %v547 = vadd.f32 %v122, %v546
    %v548 = vpop.f32.mrb[0].mxu0
    %v549 = vadd.f32 %v118, %v548
    %v550 = vpop.f32.mrb[0].mxu0
    %v551 = vadd.f32 %v122, %v550
    %552 = vmatprep.mubr.bf16.mxu0 0
    %553 = vmatmul.mubr.bf16.gmra.mrb[0].mxu0 %v160
    %v554 = vpop.f32.mrb[0].mxu0
    %v555 = vadd.f32 %v118, %v554
    %v556 = vpop.f32.mrb[0].mxu0
    %v557 = vadd.f32 %v122, %v556
    %v558 = vpop.f32.mrb[0].mxu0
    %v559 = vadd.f32 %v118, %v558
    %v560 = vpop.f32.mrb[0].mxu0
    %v561 = vadd.f32 %v122, %v560
    %562 = vmatprep.mubr.bf16.mxu0 0
    %563 = vmatmul.mubr.bf16.gmra.mrb[0].mxu0 %v161
    %v564 = vpop.f32.mrb[0].mxu0
    %v565 = vadd.f32 %v118, %v564
    %v566 = vpop.f32.mrb[0].mxu0
    %v567 = vadd.f32 %v122, %v566
    %v568 = vpop.f32.mrb[0].mxu0
    %v569 = vadd.f32 %v118, %v568
    %v570 = vpop.f32.mrb[0].mxu0
    %v571 = vadd.f32 %v122, %v570
    %572 = vdwg.mxu0
    %573 = vmatprep.subr.bf16.mxu0 %v316
    %574 = vmatpush1.bf16.msra.mxu0 %v315
    %575 = vmatprep.subr.bf16.mxu0 %v322
    %576 = vmatpush1.bf16.msra.mxu0 %v321
    %577 = vmatprep.subr.bf16.mxu0 %v328
    %578 = vmatpush1.bf16.msra.mxu0 %v327
    %579 = vmatprep.subr.bf16.mxu0 %v334
    %580 = vmatpush1.bf16.msra.mxu0 %v333
    %581 = vmatprep.subr.bf16.mxu0 %v340
    %582 = vmatpush1.bf16.msra.mxu0 %v339
    %583 = vmatprep.subr.bf16.mxu0 %v346
    %584 = vmatpush1.bf16.msra.mxu0 %v345
    %585 = vmatprep.subr.bf16.mxu0 %v352
    %586 = vmatpush1.bf16.msra.mxu0 %v351
    %587 = vmatprep.subr.bf16.mxu0 %v358
    %588 = vmatpush1.bf16.msra.mxu0 %v357
    %589 = vmatprep.subr.bf16.mxu0 0
    %590 = vmatpush1.bf16.msra.mxu0 0
    %591 = vmatprep.subr.bf16.mxu0 0
    %592 = vmatpush1.bf16.msra.mxu0 0
    %593 = vmatprep.subr.bf16.mxu0 0
    %594 = vmatpush1.bf16.msra.mxu0 0
    %595 = vmatprep.subr.bf16.mxu0 0
    %596 = vmatpush1.bf16.msra.mxu0 0
    %597 = vmatprep.subr.bf16.mxu0 0
    %598 = vmatpush1.bf16.msra.mxu0 0
    %599 = vmatprep.subr.bf16.mxu0 0
    %600 = vmatpush1.bf16.msra.mxu0 0
    %601 = vmatprep.subr.bf16.mxu0 0
    %602 = vmatpush1.bf16.msra.mxu0 0
    %603 = vmatprep.subr.bf16.mxu0 0
    %604 = vmatpush1.bf16.msra.mxu0 0
    %605 = vmatprep.mubr.bf16.mxu0 0
    %606 = vmatmul.mubr.bf16.gmra.mrb[0].mxu0 %v157
    %v607 = vpop.f32.mrb[0].mxu0
    %v608 = vadd.f32 %v126, %v607
    %v609 = vpop.f32.mrb[0].mxu0
    %v610 = vadd.f32 %v130, %v609
    %v611 = vpop.f32.mrb[0].mxu0
    %v612 = vadd.f32 %v126, %v611
    %v613 = vpop.f32.mrb[0].mxu0
    %v614 = vadd.f32 %v130, %v613
    %615 = vmatprep.mubr.bf16.mxu0 0
    %616 = vmatmul.mubr.bf16.gmra.mrb[0].mxu0 %v158
    %v617 = vpop.f32.mrb[0].mxu0
    %v618 = vadd.f32 %v126, %v617
    %v619 = vpop.f32.mrb[0].mxu0
    %v620 = vadd.f32 %v130, %v619
    %v621 = vpop.f32.mrb[0].mxu0
    %v622 = vadd.f32 %v126, %v621
    %v623 = vpop.f32.mrb[0].mxu0
    %v624 = vadd.f32 %v130, %v623
    %625 = vmatprep.mubr.bf16.mxu0 0
    %626 = vmatmul.mubr.bf16.gmra.mrb[0].mxu0 %v159
    %v627 = vpop.f32.mrb[0].mxu0
    %v628 = vadd.f32 %v126, %v627
    %v629 = vpop.f32.mrb[0].mxu0
    %v630 = vadd.f32 %v130, %v629
    %v631 = vpop.f32.mrb[0].mxu0
    %v632 = vadd.f32 %v126, %v631
    %v633 = vpop.f32.mrb[0].mxu0
    %v634 = vadd.f32 %v130, %v633
    %635 = vmatprep.mubr.bf16.mxu0 0
    %636 = vmatmul.mubr.bf16.gmra.mrb[0].mxu0 %v160
    %v637 = vpop.f32.mrb[0].mxu0
    %v638 = vadd.f32 %v126, %v637
    %v639 = vpop.f32.mrb[0].mxu0
    %v640 = vadd.f32 %v130, %v639
    %v641 = vpop.f32.mrb[0].mxu0
    %v642 = vadd.f32 %v126, %v641
    %v643 = vpop.f32.mrb[0].mxu0
    %v644 = vadd.f32 %v130, %v643
    %645 = vmatprep.mubr.bf16.mxu0 0
    %646 = vmatmul.mubr.bf16.gmra.mrb[0].mxu0 %v161
    %v647 = vpop.f32.mrb[0].mxu0
    %v648 = vadd.f32 %v126, %v647
    %v649 = vpop.f32.mrb[0].mxu0
    %v650 = vadd.f32 %v130, %v649
    %v651 = vpop.f32.mrb[0].mxu0
    %v652 = vadd.f32 %v126, %v651
    %v653 = vpop.f32.mrb[0].mxu0
    %v654 = vadd.f32 %v130, %v653
    %655 = vdwg.mxu0
    %v656 = vpack.c.bf16 %v446, %v442
    %v657 = vpack.c.bf16 %v448, %v444
    %v658 = vpack.c.bf16 %v529, %v525
    %v659 = vpack.c.bf16 %v531, %v527
    %v660 = vpack.c.bf16 %v612, %v608
    %v661 = vpack.c.bf16 %v614, %v610
    %v662 = vpack.c.bf16 %v456, %v452
    %v663 = vpack.c.bf16 %v458, %v454
    %v664 = vpack.c.bf16 %v539, %v535
    %v665 = vpack.c.bf16 %v541, %v537
    %v666 = vpack.c.bf16 %v622, %v618
    %v667 = vpack.c.bf16 %v624, %v620
    %v668 = vpack.c.bf16 %v466, %v462
    %v669 = vpack.c.bf16 %v468, %v464
    %v670 = vpack.c.bf16 %v549, %v545
    %v671 = vpack.c.bf16 %v551, %v547
    %v672 = vpack.c.bf16 %v632, %v628
    %v673 = vpack.c.bf16 %v634, %v630
    %v674 = vpack.c.bf16 %v476, %v472
    %v675 = vpack.c.bf16 %v478, %v474
    %v676 = vpack.c.bf16 %v559, %v555
    %v677 = vpack.c.bf16 %v561, %v557
    %v678 = vpack.c.bf16 %v642, %v638
    %v679 = vpack.c.bf16 %v644, %v640
    %v680 = vpack.c.bf16 %v486, %v482
    %v681 = vpack.c.bf16 %v488, %v484
    %v682 = vpack.c.bf16 %v569, %v565
    %v683 = vpack.c.bf16 %v571, %v567
    %v684 = vpack.c.bf16 %v652, %v648
    %v685 = vpack.c.bf16 %v654, %v650
    %v701 = vunpack.c.l.b16 %v656
    %v702 = vunpack.c.l.b16 %v657
    %v703 = vunpack.c.l.b16 %v658
    %v704 = vunpack.c.h.b16 %v656
    %v705 = vunpack.c.h.b16 %v657
    %v706 = vunpack.c.h.b16 %v658
    %v707 = vunpack.c.l.b16 %v662
    %v708 = vunpack.c.l.b16 %v663
    %v709 = vunpack.c.l.b16 %v664
    %v710 = vunpack.c.h.b16 %v662
    %v711 = vunpack.c.h.b16 %v663
    %v712 = vunpack.c.h.b16 %v664
    %v713 = vunpack.c.l.b16 %v668
    %v714 = vunpack.c.l.b16 %v669
    %v715 = vunpack.c.l.b16 %v670
    %v716 = vunpack.c.h.b16 %v668
    %v717 = vunpack.c.h.b16 %v669
    %v718 = vunpack.c.h.b16 %v670
    %v719 = vunpack.c.l.b16 %v674
    %v720 = vunpack.c.l.b16 %v675
    %v721 = vunpack.c.l.b16 %v676
    %v722 = vunpack.c.h.b16 %v674
    %v723 = vunpack.c.h.b16 %v675
    %v724 = vunpack.c.h.b16 %v676
    %v725 = vunpack.c.l.b16 %v680
    %v726 = vunpack.c.l.b16 %v681
    %v727 = vunpack.c.l.b16 %v682
    %v728 = vunpack.c.h.b16 %v680
    %v729 = vunpack.c.h.b16 %v681
    %v730 = vunpack.c.h.b16 %v682
    %v731 = vpack.c.b16 %v702, %v701
    %v732 = vpack.c.b16 %v703, %v703
    %v733 = vpack.c.b16 %v705, %v704
    %v734 = vpack.c.b16 %v706, %v706
    %v735 = vpack.c.b16 %v708, %v707
    %v736 = vpack.c.b16 %v709, %v709
    %v737 = vpack.c.b16 %v711, %v710
    %v738 = vpack.c.b16 %v712, %v712
    %v739 = vpack.c.b16 %v714, %v713
    %v740 = vpack.c.b16 %v715, %v715
    %v741 = vpack.c.b16 %v717, %v716
    %v742 = vpack.c.b16 %v718, %v718
    %v743 = vpack.c.b16 %v720, %v719
    %v744 = vpack.c.b16 %v721, %v721
    %v745 = vpack.c.b16 %v723, %v722
    %v746 = vpack.c.b16 %v724, %v724
    %v747 = vpack.c.b16 %v726, %v725
    %v748 = vpack.c.b16 %v727, %v727
    %v749 = vpack.c.b16 %v729, %v728
    %v750 = vpack.c.b16 %v730, %v730
    %771 = vst [vmem:[#allocation7] sm:$0xff] %v731
    %772 = vst [vmem:[#allocation7 + $0x8] sm:$0xf] %v732
    %773 = vst [vmem:[#allocation7 + $0xc] sm:$0xff] %v733
    %774 = vst [vmem:[#allocation7 + $0x14] sm:$0xf] %v734
    %775 = vst [vmem:[#allocation7 + $0x18] sm:$0xff] %v735
    %776 = vst [vmem:[#allocation7 + $0x20] sm:$0xf] %v736
    %777 = vst [vmem:[#allocation7 + $0x24] sm:$0xff] %v737
    %778 = vst [vmem:[#allocation7 + $0x2c] sm:$0xf] %v738
    %779 = vst [vmem:[#allocation7 + $0x30] sm:$0xff] %v739
    %780 = vst [vmem:[#allocation7 + $0x38] sm:$0xf] %v740
    %781 = vst [vmem:[#allocation7 + $0x3c] sm:$0xff] %v741
    %782 = vst [vmem:[#allocation7 + $0x44] sm:$0xf] %v742
    %783 = vst [vmem:[#allocation7 + $0x48] sm:$0xff] %v743
    %784 = vst [vmem:[#allocation7 + $0x50] sm:$0xf] %v744
    %785 = vst [vmem:[#allocation7 + $0x54] sm:$0xff] %v745
    %786 = vst [vmem:[#allocation7 + $0x5c] sm:$0xf] %v746
    %787 = vst [vmem:[#allocation7 + $0x60] sm:$0xff] %v747
    %788 = vst [vmem:[#allocation7 + $0x68] sm:$0xf] %v748
    %789 = vst [vmem:[#allocation7 + $0x6c] sm:$0xff] %v749
    %790 = vst [vmem:[#allocation7 + $0x74] sm:$0xf] %v750
    %v806 = vunpack.c.l.b16 %v659
    %v807 = vunpack.c.l.b16 %v660
    %v808 = vunpack.c.l.b16 %v661
    %v809 = vunpack.c.h.b16 %v659
    %v810 = vunpack.c.h.b16 %v660
    %v811 = vunpack.c.h.b16 %v661
    %v812 = vunpack.c.l.b16 %v665
    %v813 = vunpack.c.l.b16 %v666
    %v814 = vunpack.c.l.b16 %v667
    %v815 = vunpack.c.h.b16 %v665
    %v816 = vunpack.c.h.b16 %v666
    %v817 = vunpack.c.h.b16 %v667
    %v818 = vunpack.c.l.b16 %v671
    %v819 = vunpack.c.l.b16 %v672
    %v820 = vunpack.c.l.b16 %v673
    %v821 = vunpack.c.h.b16 %v671
    %v822 = vunpack.c.h.b16 %v672
    %v823 = vunpack.c.h.b16 %v673
    %v824 = vunpack.c.l.b16 %v677
    %v825 = vunpack.c.l.b16 %v678
    %v826 = vunpack.c.l.b16 %v679
    %v827 = vunpack.c.h.b16 %v677
    %v828 = vunpack.c.h.b16 %v678
    %v829 = vunpack.c.h.b16 %v679
    %v830 = vunpack.c.l.b16 %v683
    %v831 = vunpack.c.l.b16 %v684
    %v832 = vunpack.c.l.b16 %v685
    %v833 = vunpack.c.h.b16 %v683
    %v834 = vunpack.c.h.b16 %v684
    %v835 = vunpack.c.h.b16 %v685
    %v836 = vpack.c.b16 %v807, %v806
    %v837 = vpack.c.b16 %v808, %v808
    %v838 = vpack.c.b16 %v810, %v809
    %v839 = vpack.c.b16 %v811, %v811
    %v840 = vpack.c.b16 %v813, %v812
    %v841 = vpack.c.b16 %v814, %v814
    %v842 = vpack.c.b16 %v816, %v815
    %v843 = vpack.c.b16 %v817, %v817
    %v844 = vpack.c.b16 %v819, %v818
    %v845 = vpack.c.b16 %v820, %v820
    %v846 = vpack.c.b16 %v822, %v821
    %v847 = vpack.c.b16 %v823, %v823
    %v848 = vpack.c.b16 %v825, %v824
    %v849 = vpack.c.b16 %v826, %v826
    %v850 = vpack.c.b16 %v828, %v827
    %v851 = vpack.c.b16 %v829, %v829
    %v852 = vpack.c.b16 %v831, %v830
    %v853 = vpack.c.b16 %v832, %v832
    %v854 = vpack.c.b16 %v834, %v833
    %v855 = vpack.c.b16 %v835, %v835
    %876 = vst [vmem:[#allocation8] sm:$0xff] %v836
    %877 = vst [vmem:[#allocation8 + $0x8] sm:$0xf] %v837
    %878 = vst [vmem:[#allocation8 + $0xc] sm:$0xff] %v838
    %879 = vst [vmem:[#allocation8 + $0x14] sm:$0xf] %v839
    %880 = vst [vmem:[#allocation8 + $0x18] sm:$0xff] %v840
    %881 = vst [vmem:[#allocation8 + $0x20] sm:$0xf] %v841
    %882 = vst [vmem:[#allocation8 + $0x24] sm:$0xff] %v842
    %883 = vst [vmem:[#allocation8 + $0x2c] sm:$0xf] %v843
    %884 = vst [vmem:[#allocation8 + $0x30] sm:$0xff] %v844
    %885 = vst [vmem:[#allocation8 + $0x38] sm:$0xf] %v845
    %886 = vst [vmem:[#allocation8 + $0x3c] sm:$0xff] %v846
    %887 = vst [vmem:[#allocation8 + $0x44] sm:$0xf] %v847
    %888 = vst [vmem:[#allocation8 + $0x48] sm:$0xff] %v848
    %889 = vst [vmem:[#allocation8 + $0x50] sm:$0xf] %v849
    %890 = vst [vmem:[#allocation8 + $0x54] sm:$0xff] %v850
    %891 = vst [vmem:[#allocation8 + $0x5c] sm:$0xf] %v851
    %892 = vst [vmem:[#allocation8 + $0x60] sm:$0xff] %v852
    %893 = vst [vmem:[#allocation8 + $0x68] sm:$0xf] %v853
    %894 = vst [vmem:[#allocation8 + $0x6c] sm:$0xff] %v854
    %895 = vst [vmem:[#allocation8 + $0x74] sm:$0xf] %v855
    // Predicated region
    $region22: #{tpu_custom_call.1} parent=1 // pred_check
      _
    $region23: #{tpu_custom_call.1} parent=1 // pred_check_branch
      %897 = sbr.rel (0) target = $region25
    $region24: #{tpu_custom_call.1} parent=1 // pred_region
      %s899 = ssub.s32 1920, 1920
      %900 = vsyncadd [#allocation4], %s899
      %s901 = sshll.u32 [#allocation7], 4
      %s902 = int_to_ptr.vmem [resolvable:$true] %s901
      %907 = dma.vmem_to_hbm [thread:$0]  %s902, 1920, %s3, [#allocation4], 192, 192, 12
    $region25: #{tpu_custom_call.1} parent=1 // pred_fallthru
      _
    // Predicated region
    $region26: #{tpu_custom_call.1} parent=1 // pred_check
      _
    $region27: #{tpu_custom_call.1} parent=1 // pred_check_branch
      %909 = sbr.rel (0) target = $region29
    $region28: #{tpu_custom_call.1} parent=1 // pred_region
      %s911 = ssub.s32 1920, 1920
      %912 = vsyncadd [#allocation9], %s911
      %s913 = sshll.u32 [#allocation8], 4
      %s914 = int_to_ptr.vmem [resolvable:$true] %s913
      %919 = dma.vmem_to_hbm [thread:$0]  %s914, 1920, %s4, [#allocation9], 192, 192, 12
    $region29: #{tpu_custom_call.1} parent=1 // pred_fallthru
      _
    // Predicated region
    $region30: #{tpu_custom_call.1} parent=1 // pred_check
      _
    $region31: #{tpu_custom_call.1} parent=1 // pred_check_branch
      %921 = sbr.rel (0) target = $region33
    $region32: #{tpu_custom_call.1} parent=1 // pred_region
      %922 = dma.done [#allocation4], 1920
    $region33: #{tpu_custom_call.1} parent=1 // pred_fallthru
      _
    // Predicated region
    $region34: #{tpu_custom_call.1} parent=1 // pred_check
      _
    $region35: #{tpu_custom_call.1} parent=1 // pred_check_branch
      %924 = sbr.rel (0) target = $region37
    $region36: #{tpu_custom_call.1} parent=1 // pred_region
      %925 = dma.done [#allocation9], 1920
    $region37: #{tpu_custom_call.1} parent=1 // pred_fallthru
      _
    %926 = vsyncpa [#allocation3], 1
    %927 = vsyncpa [#allocation6], 1
    %928 = vsyncpa [#allocation4], 1
    %929 = vsyncpa [#allocation9], 1

</llo_original>
